<compile_context>
chip_gen: v7x
topology: tpu7x:2x2x1
jax: 0.10.0
libtpu: 0.0.40
codegen_flags: <defaults>
</compile_context>

<pallas_src>
import jax
import jax.numpy as jnp
from jax.experimental import pallas as pl
from jax.experimental.pallas import tpu as pltpu


def _round_up(x, m):
    return ((x + m - 1) // m) * m


def aux_cls_stream_kernel(x_ref, w_ref, o_ref, acc_ref):
    """Multi-step path: stream (tn, C, thw) chunks, accumulate, finalize."""
    k = pl.program_id(1)

    @pl.when(k == 0)
    def _init():
        acc_ref[...] = jnp.zeros_like(acc_ref)

    # Cross-lane (XLU) reduction over this H*W chunk; accumulate in f32.
    acc_ref[...] += jnp.sum(x_ref[...].astype(jnp.float32), axis=-1)

    @pl.when(k == pl.num_programs(1) - 1)
    def _finalize():
        # 1/(H*W) is already folded into w_ref by the wrapper.
        o_ref[...] = jnp.dot(
            acc_ref[...], w_ref[...], preferred_element_type=jnp.float32
        ).astype(o_ref.dtype)


def aux_cls_single_kernel(x_ref, w_ref, o_ref):
    """Single-step fast path: whole H*W extent in one block, no accumulator."""
    gap = jnp.sum(x_ref[...].astype(jnp.float32), axis=-1)          # (tn, C)
    o_ref[...] = jnp.dot(
        gap, w_ref[...], preferred_element_type=jnp.float32
    ).astype(o_ref.dtype)


def aux_cls_forward(x_nchw, weight_ac, *, thw=None):
    """x_nchw: (N, C, H, W).  weight_ac: (A, C) = nn.Linear(C, A, bias=False).weight.

    Returns (N, A) float32.
    """
    # TODO(synk): PyTorch's torch.squeeze drops the batch dim when N == 1; this
    # wrapper always returns (N, A).
    N, C, H, W = x_nchw.shape
    A = weight_ac.shape[0]
    HW = H * W

    # Native layout: free reshape, no extra HBM pass.  H*W sits on lanes.
    x = x_nchw.reshape(N, C, HW)
    # Fold the average-pool scale into the tiny resident weight: out = gap @ W^T.
    w_ca = (weight_ac.T * (1.0 / HW)).astype(jnp.float32)

    # --- batch tiling -------------------------------------------------------
    # Keep the output block's sublane dim either 8-aligned or the full batch
    # (legal block shapes); when N allows it this also gives >=2 blocks on the
    # "parallel" axis so v7x's two TensorCores both get work.
    if N >= 16 and N % 8 == 0:
        tn = 8
    else:
        tn = N

    # --- VMEM budget & reduction-chunk size --------------------------------
    itemsize = jnp.dtype(x.dtype).itemsize
    sublane = max(8, 32 // itemsize)              # f32 -> 8 rows/vreg, bf16 -> 16
    try:
        vmem_phys = pltpu.get_tpu_info().vmem_capacity_bytes
    except Exception:
        vmem_phys = 64 << 20                      # v7x per-TC physical (worst case)
    vmem_limit = min(int(vmem_phys * 3 // 4), 112 << 20)
    x_budget = vmem_limit * 2 // 3                # double-buffered x blocks

    def padded_x_bytes(t):
        # Real (sublane/lane padded) VMEM footprint of the double-buffered block.
        return 2 * tn * _round_up(C, sublane) * _round_up(t, 128) * itemsize

    if thw is None:
        if padded_x_bytes(HW) <= x_budget:
            thw = HW                              # single-step fast path
        else:
            cands = [d for d in range(128, HW, 128) if HW % d == 0]
            good = [d for d in cands if padded_x_bytes(d) <= x_budget]
            if good:
                thw = max(good)
            elif cands:
                thw = min(cands)
            else:
                thw = HW
    assert HW % thw == 0 and (thw == HW or thw % 128 == 0), (
        "thw must divide H*W and be lane-aligned (multiple of 128) or the full extent")

    cost = pl.CostEstimate(
        flops=N * C * HW + 2 * N * C * A,         # spatial adds + tiny matmul
        transcendentals=0,
        bytes_accessed=N * C * HW * itemsize + C * A * 4 + N * A * 4,
    )

    if thw == HW:
        # ---- single reduction step: skip init/accumulate/finalize machinery
        out = pl.pallas_call(
            aux_cls_single_kernel,
            out_shape=jax.ShapeDtypeStruct((N, A), jnp.float32),
            grid_spec=pltpu.PrefetchScalarGridSpec(
                num_scalar_prefetch=0,
                grid=(N // tn,),
                in_specs=[
                    pl.BlockSpec((tn, C, HW), lambda n: (n, 0, 0)),
                    pl.BlockSpec((C, A), lambda n: (0, 0)),     # resident weight
                ],
                out_specs=pl.BlockSpec((tn, A), lambda n: (n, 0)),
            ),
            compiler_params=pltpu.CompilerParams(
                dimension_semantics=("parallel",),
                vmem_limit_bytes=vmem_limit,
            ),
            cost_estimate=cost,
        )(x, w_ca)
    else:
        # ---- streamed reduction: reduction axis last ("arbitrary")
        out = pl.pallas_call(
            aux_cls_stream_kernel,
            out_shape=jax.ShapeDtypeStruct((N, A), jnp.float32),
            grid_spec=pltpu.PrefetchScalarGridSpec(
                num_scalar_prefetch=0,
                grid=(N // tn, HW // thw),
                in_specs=[
                    pl.BlockSpec((tn, C, thw), lambda n, k: (n, 0, k)),
                    pl.BlockSpec((C, A), lambda n, k: (0, 0)),  # resident weight
                ],
                out_specs=pl.BlockSpec((tn, A), lambda n, k: (n, 0)),
                scratch_shapes=[pltpu.VMEM((tn, C), jnp.float32)],
            ),
            compiler_params=pltpu.CompilerParams(
                dimension_semantics=("parallel", "arbitrary"),
                vmem_limit_bytes=vmem_limit,
            ),
            cost_estimate=cost,
        )(x, w_ca)
    return out


if __name__ == "__main__":
    # Module hyperparameters (deterministic, synthetic weights).
    N, C, H, W = 2, 4, 16, 16     # batch, channel_num, spatial
    A = 8                         # aug_num

    key = jax.random.PRNGKey(0)
    kx, kw = jax.random.split(key)
    x = jax.random.normal(kx, (N, C, H, W), dtype=jnp.float32)
    # nn.Linear(channel_num, aug_num, bias=False).weight has shape (A, C)
    weight = jax.random.normal(kw, (A, C), dtype=jnp.float32) * 0.1

    # Pure-JAX reference (same semantics as the PyTorch forward).
    ref = jnp.mean(x, axis=(2, 3)) @ weight.T

    # Auto path: single-step fast path at these toy sizes.
    out_fast = jax.block_until_ready(aux_cls_forward(x, weight))
    # Forced multi-step path (thw=128 splits H*W=256 into 2 reduction chunks)
    # so the streamed-accumulator kernel is exercised too.
    out_stream = jax.block_until_ready(aux_cls_forward(x, weight, thw=128))

    assert out_fast.shape == (N, A) and out_stream.shape == (N, A)
    assert jnp.allclose(out_fast, ref, atol=1e-5, rtol=1e-5)
    assert jnp.allclose(out_stream, ref, atol=1e-5, rtol=1e-5)

    print("KERNEL_OK")
</pallas_src>

<mosaic_0001>
module attributes {stable_mosaic.version = 11 : i64} {
  func.func @aux_cls_single_kernel(%arg0: i32, %arg1: memref<2x4x256xf32, #tpu.memory_space<vmem>>, %arg2: memref<4x8xf32, #tpu.memory_space<vmem>>, %arg3: memref<2x8xf32, #tpu.memory_space<vmem>>) attributes {dimension_semantics = [#tpu.dimension_semantics<parallel>], iteration_bounds = array<i64: 1>, scalar_prefetch = 0 : i64, scratch_operands = 0 : i64, tpu.core_type = #tpu.core_type<tc>, window_params = [{transform_indices = @transform_0, window_bounds = array<i64: 2, 4, 256>}, {pipeline_mode = #tpu.pipeline_mode<synchronous>, transform_indices = @transform_1, window_bounds = array<i64: 4, 8>}, {transform_indices = @transform_2, window_bounds = array<i64: 2, 8>}]} {
    %c0 = arith.constant 0 : index
    %c0_0 = arith.constant 0 : index
    %c0_1 = arith.constant 0 : index
    %0 = vector.load %arg1[%c0, %c0_0, %c0_1] : memref<2x4x256xf32, #tpu.memory_space<vmem>>, vector<2x4x256xf32>
    %cst = arith.constant dense<0.000000e+00> : vector<2x4xf32>
    %1 = vector.multi_reduction <add>, %0, %cst [2] : vector<2x4x256xf32> to vector<2x4xf32>
    %c0_2 = arith.constant 0 : index
    %c0_3 = arith.constant 0 : index
    %2 = vector.load %arg2[%c0_2, %c0_3] : memref<4x8xf32, #tpu.memory_space<vmem>>, vector<4x8xf32>
    %cst_4 = arith.constant dense<0.000000e+00> : vector<2x8xf32>
    %3 = tpu.matmul %1, %2, %cst_4 {dimension_numbers = #tpu.dot_dimension_numbers<[1], [0], [0], [1], [0, 0, 1, 1], [], []>} : vector<2x4xf32>, vector<4x8xf32>, vector<2x8xf32> -> vector<2x8xf32>
    %c0_5 = arith.constant 0 : index
    %c0_6 = arith.constant 0 : index
    %4 = vector.load %arg3[%c0_5, %c0_6] : memref<2x8xf32, #tpu.memory_space<vmem>>, vector<2x8xf32>
    tpu.vector_store %arg3[%c0_5, %c0_6], %3 {strides = array<i32>} : memref<2x8xf32, #tpu.memory_space<vmem>>, vector<2x8xf32>,
    return
  }
  func.func @transform_0(%arg0: i32) -> (i32, i32, i32) {
    %c0_i32 = arith.constant 0 : i32
    %c0_i32_0 = arith.constant 0 : i32
    %c0_i32_1 = arith.constant 0 : i32
    return %arg0, %c0_i32, %c0_i32_0 : i32, i32, i32
  }
  func.func @transform_1(%arg0: i32) -> (i32, i32) {
    %c0_i32 = arith.constant 0 : i32
    %c0_i32_0 = arith.constant 0 : i32
    %c0_i32_1 = arith.constant 0 : i32
    return %c0_i32, %c0_i32_0 : i32, i32
  }
  func.func @transform_2(%arg0: i32) -> (i32, i32) {
    %c0_i32 = arith.constant 0 : i32
    %c0_i32_0 = arith.constant 0 : i32
    return %arg0, %c0_i32 : i32, i32
  }
}

</mosaic_0001>

<llo_original>
// kernel: tpu_custom_call.1
$region0: #{tpu_custom_call.1}
  #allocation0 [shape = 'u32[]', space=smem, size = 0x4, offset = 0x4, fixed_abs, tag = 'smem constant byte address 0x4 - core index']
  #allocation1 [shape = 'u32[144,128]{1,0:T(1,128)}', space=vmem, size = 0x12000, scoped, tag = 'internal scratch']
  %s0 = inlined_call_operand.hbm [shape: f32[2,4,256], index: 0, kind: input, shape index: {}]
  %s1 = inlined_call_operand.hbm [shape: f32[4,8], index: 1, kind: input, shape index: {}]
  %s2 = inlined_call_operand.hbm [shape: f32[2,8], index: 2, kind: output, shape index: {}]
  %s3 = sld [smem:[#allocation0]]
  $region26: #{tpu_custom_call.1} parent=0
    _
  %s5 = ssub.s32 1, %s3
  %s6 = scalar_select 0, %s5, %s3
  $region1: #{tpu_custom_call.1} parent=0
    #allocation2 [shape = 'u8[8192]{0}', space=vmem, size = 0x2000, scoped, tag = 'input window, operand 0, single buffered']
    #allocation3 [shape = 's32[1]{0}', space=sflag, size = 0x4, scoped, tag = 'scoped memory for tpu_custom_call.1']
    #allocation4 [shape = 's32[1]{0}', space=sflag, size = 0x4, scoped, tag = 'scoped memory for tpu_custom_call.1']
    #allocation5 [shape = 'u8[2048]{0}', space=vmem, size = 0x800, scoped, tag = 'input window, operand 1, single buffered']
    #allocation6 [shape = 's32[1]{0}', space=sflag, size = 0x4, scoped, tag = 'scoped memory for tpu_custom_call.1']
    #allocation7 [shape = 'u8[1024]{0}', space=vmem, size = 0x400, scoped, tag = 'output window, operand 0, single buffered']
    %7 = vsyncpa [#allocation3], 0
    %8 = vsyncpa [#allocation6], 0
    %9 = vsyncpa [#allocation4], 0
    // Predicated region
    $region2: #{tpu_custom_call.1} parent=1 // pred_check
      _
    $region3: #{tpu_custom_call.1} parent=1 // pred_check_branch
      %11 = sbr.rel (0) target = $region5
    $region4: #{tpu_custom_call.1} parent=1 // pred_region
      %s13 = ssub.s32 256, 256
      %14 = vsyncadd [#allocation3], %s13
      %s15 = sshll.u32 [#allocation2], 4
      %s16 = int_to_ptr.vmem [resolvable:$true] %s15
      %21 = dma.hbm_to_vmem [thread:$0]  %s0, 256, %s16, [#allocation3], 128, 128, 8
    $region5: #{tpu_custom_call.1} parent=1 // pred_fallthru
      _
    // Predicated region
    $region6: #{tpu_custom_call.1} parent=1 // pred_check
      _
    $region7: #{tpu_custom_call.1} parent=1 // pred_check_branch
      %23 = sbr.rel (0) target = $region9
    $region8: #{tpu_custom_call.1} parent=1 // pred_region
      %s25 = ssub.s32 64, 64
      %26 = vsyncadd [#allocation6], %s25
      %s28 = sshll.u32 [#allocation5], 4
      %s29 = int_to_ptr.vmem [resolvable:$true] %s28
      %31 = dma.hbm_to_vmem [thread:$0]  %s1, 64, %s29, [#allocation6]
    $region9: #{tpu_custom_call.1} parent=1 // pred_fallthru
      _
    // Predicated region
    $region10: #{tpu_custom_call.1} parent=1 // pred_check
      _
    $region11: #{tpu_custom_call.1} parent=1 // pred_check_branch
      %33 = sbr.rel (0) target = $region13
    $region12: #{tpu_custom_call.1} parent=1 // pred_region
      %34 = dma.done [#allocation3], 256
    $region13: #{tpu_custom_call.1} parent=1 // pred_fallthru
      _
    // Predicated region
    $region14: #{tpu_custom_call.1} parent=1 // pred_check
      _
    $region15: #{tpu_custom_call.1} parent=1 // pred_check_branch
      %36 = sbr.rel (0) target = $region17
    $region16: #{tpu_custom_call.1} parent=1 // pred_region
      %37 = dma.done [#allocation6], 64
    $region17: #{tpu_custom_call.1} parent=1 // pred_fallthru
      _
    %v38 = vld [vmem:[#allocation2] sm:$0xff]
    %v39 = vld [vmem:[#allocation2 + $0x8] sm:$0xff]
    %v42 = vcombine.high %v38, %v38
    %v43 = vcombine.high %v39, %v39
    %vm46 = vcmask 1043456
    %v47 = vsel %vm46, %v38, 0.0
    %v48 = vsel %vm46, %v42, 0.0
    %v49 = vadd.f32 %v47, %v48
    %50 = vadd.xlane.f32.xlu0 %v49
    %v51 = vpop.xlane.xlu0 %50
    %v52 = vsel %vm46, %v39, 0.0
    %v53 = vsel %vm46, %v43, 0.0
    %v54 = vadd.f32 %v52, %v53
    %55 = vadd.xlane.f32.xlu0 %v54
    %v56 = vpop.xlane.xlu0 %55
    %v57 = vld [vmem:[#allocation5] sm:$0xf]
    %v60 = vlaneseq
    %v61 = vand.u32 %v60, 127
    %v62 = vlaneseq
    %v63 = vshrl.u32 %v62, 7
    %v64 = vsub.s32 %v61, %v63
    %v65 = vrot.slane %v51, %v64
    %v66 = vlaneseq
    %v67 = vshrl.u32 %v66, 7
    %v68 = vsub.s32 %v61, %v67
    %v69 = vrot.slane %v56, %v68
    %vm70 = vcmask 1041409
    %v71 = vsel %vm70, %v69, %v65
    %vm72 = vcmask 31744
    %v73 = vsel %vm72, %v71, 0
    %v76 = vsel %vm46, %v57, 0
    %78 = vmatprep.subr.mxu0 0.0
    %79 = vmatpush1.msra.mxu0 %v76
    %80 = vmatprep.subr.mxu0 0.0
    %81 = vmatpush1.msra.mxu0 0.0
    %82 = vmatprep.subr.mxu0 0.0
    %83 = vmatpush1.msra.mxu0 0.0
    %84 = vmatprep.subr.mxu0 0.0
    %85 = vmatpush1.msra.mxu0 0.0
    %86 = vmatprep.subr.mxu0 0.0
    %87 = vmatpush1.msra.mxu0 0.0
    %88 = vmatprep.subr.mxu0 0.0
    %89 = vmatpush1.msra.mxu0 0.0
    %90 = vmatprep.subr.mxu0 0.0
    %91 = vmatpush1.msra.mxu0 0.0
    %92 = vmatprep.subr.mxu0 0.0
    %93 = vmatpush1.msra.mxu0 0.0
    %94 = vmatprep.subr.mxu0 0.0
    %95 = vmatpush1.msra.mxu0 0.0
    %96 = vmatprep.subr.mxu0 0.0
    %97 = vmatpush1.msra.mxu0 0.0
    %98 = vmatprep.subr.mxu0 0.0
    %99 = vmatpush1.msra.mxu0 0.0
    %100 = vmatprep.subr.mxu0 0.0
    %101 = vmatpush1.msra.mxu0 0.0
    %102 = vmatprep.subr.mxu0 0.0
    %103 = vmatpush1.msra.mxu0 0.0
    %104 = vmatprep.subr.mxu0 0.0
    %105 = vmatpush1.msra.mxu0 0.0
    %106 = vmatprep.subr.mxu0 0.0
    %107 = vmatpush1.msra.mxu0 0.0
    %108 = vmatprep.subr.mxu0 0.0
    %109 = vmatpush1.msra.mxu0 0.0
    %110 = vmatprep.subr.mxu0 0.0
    %111 = vmatpush1.msra.mxu0 0.0
    %112 = vmatprep.subr.mxu0 0.0
    %113 = vmatpush1.msra.mxu0 0.0
    %114 = vmatprep.subr.mxu0 0.0
    %115 = vmatpush1.msra.mxu0 0.0
    %116 = vmatprep.subr.mxu0 0.0
    %117 = vmatpush1.msra.mxu0 0.0
    %118 = vmatprep.subr.mxu0 0.0
    %119 = vmatpush1.msra.mxu0 0.0
    %120 = vmatprep.subr.mxu0 0.0
    %121 = vmatpush1.msra.mxu0 0.0
    %122 = vmatprep.subr.mxu0 0.0
    %123 = vmatpush1.msra.mxu0 0.0
    %124 = vmatprep.subr.mxu0 0.0
    %125 = vmatpush1.msra.mxu0 0.0
    %126 = vmatprep.subr.mxu0 0.0
    %127 = vmatpush1.msra.mxu0 0.0
    %128 = vmatprep.subr.mxu0 0.0
    %129 = vmatpush1.msra.mxu0 0.0
    %130 = vmatprep.subr.mxu0 0.0
    %131 = vmatpush1.msra.mxu0 0.0
    %132 = vmatprep.subr.mxu0 0.0
    %133 = vmatpush1.msra.mxu0 0.0
    %134 = vmatprep.subr.mxu0 0.0
    %135 = vmatpush1.msra.mxu0 0.0
    %136 = vmatprep.subr.mxu0 0.0
    %137 = vmatpush1.msra.mxu0 0.0
    %138 = vmatprep.subr.mxu0 0.0
    %139 = vmatpush1.msra.mxu0 0.0
    %140 = vmatprep.subr.mxu0 0.0
    %141 = vmatpush1.msra.mxu0 0.0
    %142 = vmatprep.mubr.f32.mxu0 0.0
    %143 = vmatmul.mubr.f32.gmra.mrb[0].mxu0 %v73
    %v144 = vpop.f32.mrb[0].mxu0
    %v145 = vadd.f32 0.0, %v144
    %v146 = vpop.f32.mrb[0].mxu0
    %147 = vdwg.mxu0
    %vm148 = vcmask 58368
    %149 = vst.msk [vmem:[#allocation7] sm:$0x3] %vm148, %v145
    // Predicated region
    $region18: #{tpu_custom_call.1} parent=1 // pred_check
      _
    $region19: #{tpu_custom_call.1} parent=1 // pred_check_branch
      %151 = sbr.rel (0) target = $region21
    $region20: #{tpu_custom_call.1} parent=1 // pred_region
      %s153 = ssub.s32 32, 32
      %154 = vsyncadd [#allocation4], %s153
      %s156 = sshll.u32 [#allocation7], 4
      %s157 = int_to_ptr.vmem [resolvable:$true] %s156
      %159 = dma.vmem_to_hbm [thread:$0]  %s157, 32, %s2, [#allocation4]
    $region21: #{tpu_custom_call.1} parent=1 // pred_fallthru
      _
    // Predicated region
    $region22: #{tpu_custom_call.1} parent=1 // pred_check
      _
    $region23: #{tpu_custom_call.1} parent=1 // pred_check_branch
      %161 = sbr.rel (0) target = $region25
    $region24: #{tpu_custom_call.1} parent=1 // pred_region
      %162 = dma.done [#allocation4], 32
    $region25: #{tpu_custom_call.1} parent=1 // pred_fallthru
      _
    %163 = vsyncpa [#allocation3], 1
    %164 = vsyncpa [#allocation6], 1
    %165 = vsyncpa [#allocation4], 1

</llo_original>
